<compile_context>
chip_gen: v7x
topology: tpu7x:2x2x1
jax: 0.10.0
libtpu: 0.0.40
codegen_flags: <defaults>
</compile_context>

<pallas_src>
import jax
import jax.numpy as jnp
from jax.experimental import pallas as pl
from jax.experimental.pallas import tpu as pltpu

# ---------------- configuration (consistent with the module) ----------------
INPUT_DIM = 64        # input_dim
HIDDEN    = 32        # hidden_dim[0]  (LSTM hidden size)
OUT1      = 32        # hidden_dim[1]  (self.output)
OUT2      = 16        # hidden_dim[2]
OUT3      = 8         # hidden_dim[3]
NDIR      = 2         # bidirection=True
BATCH     = 8
LSTM_FEAT = HIDDEN * NDIR      # 64  (feature size of LSTM output)
GATE_W    = 3 * HIDDEN * NDIR  # 192 (i, g, o for both directions, f pruned)


# ---------------- Pallas kernel ---------------------------------------------
def lstm_predictor_kernel(x_ref, wg_ref, bg_ref, wm_ref, vm_ref, out_ref):
    """Single fused forward pass for one batch tile.

    wg_ref : (2, 64, 192)  pruned+interleaved gate weights (layer 0 / layer 1)
    bg_ref : (2, 1, 192)   combined b_ih + b_hh gate biases
    wm_ref : (64, 32)      cols 0:16 = (wo @ wf1) folded weight,
                           rows 0:16 cols 16:24 = wf2 (16->8)
    vm_ref : (2, 32)       row 0 = [ba(16) | bf2(8) | wf3^T(8)], row 1[0] = bf3
    """
    D2 = 2 * HIDDEN  # 64

    def lstm_layer(inp, layer):
        # One matmul for i/g/o of both directions (f pruned; c_prev == 0).
        g = (jnp.dot(inp, wg_ref[layer], preferred_element_type=jnp.float32)
             + bg_ref[layer])
        i = jax.nn.sigmoid(g[:, 0 * D2:1 * D2])
        gg = jnp.tanh(g[:, 1 * D2:2 * D2])
        o = jax.nn.sigmoid(g[:, 2 * D2:3 * D2])
        # columns 0:H are the fwd direction, H:2H the bwd direction, matching
        # torch's concat([h_fwd, h_bwd]) output ordering.
        return o * jnp.tanh(i * gg)

    h = lstm_layer(x_ref[...], 0)
    h = lstm_layer(h, 1)

    # LeakyReLU(0.2); Dropout is identity in eval; Flatten is a no-op (seq=1).
    # TODO(synk): Dropout(p=0.5) modeled as identity (eval-mode forward only).
    h = jnp.where(h > 0, h, 0.2 * h)

    # self.output (64->32) folded with layer_final Linear(32->16), then Tanh.
    y = jnp.tanh(jnp.dot(h, wm_ref[:, 0:OUT2],
                         preferred_element_type=jnp.float32)
                 + vm_ref[0:1, 0:OUT2])
    # layer_final Linear(16->8) + Tanh.
    y = jnp.tanh(jnp.dot(y, wm_ref[0:OUT2, OUT2:OUT2 + OUT3],
                         preferred_element_type=jnp.float32)
                 + vm_ref[0:1, OUT2:OUT2 + OUT3])
    # layer_final Linear(8->1): broadcast-mul + lane reduction (skip the MXU).
    wf3_row = vm_ref[0:1, OUT2 + OUT3:OUT2 + 2 * OUT3]   # (1, 8)
    bf3 = vm_ref[1:2, 0:1]                               # (1, 1)
    out = jnp.sum(y * wf3_row, axis=-1, keepdims=True) + bf3
    out_ref[...] = out.astype(out_ref.dtype)


# ---------------- wrapper ----------------------------------------------------
def lstm_predictor_forward(x, packed, *, batch_tile=None):
    B, D = x.shape
    assert D == INPUT_DIM
    bt = batch_tile if batch_tile is not None else min(B, 256)
    assert B % bt == 0, "batch must be divisible by the batch tile"
    grid = (B // bt,)

    def _weight_spec(arr):
        shape = arr.shape
        return pl.BlockSpec(shape, lambda i, _s=shape: (0,) * len(_s))

    return pl.pallas_call(
        lstm_predictor_kernel,
        out_shape=jax.ShapeDtypeStruct((B, 1), jnp.float32),
        grid=grid,
        in_specs=[
            pl.BlockSpec((bt, D), lambda i: (i, 0)),
            _weight_spec(packed["wg"]),
            _weight_spec(packed["bg"]),
            _weight_spec(packed["w_mlp"]),
            _weight_spec(packed["v_mlp"]),
        ],
        out_specs=pl.BlockSpec((bt, 1), lambda i: (i, 0)),
        compiler_params=pltpu.CompilerParams(
            dimension_semantics=("parallel",)),   # v7x: split tiles across TCs
    )(x, packed["wg"], packed["bg"], packed["w_mlp"], packed["v_mlp"])


# ---------------- raw (torch-layout) parameters ------------------------------
def init_raw_params(key):
    """Random parameters in the same layout PyTorch would use."""
    ks = jax.random.split(key, 14)

    def nrm(k, shape, scale=0.1):
        return (scale * jax.random.normal(k, shape)).astype(jnp.float32)

    H = HIDDEN
    return {
        # LSTM layer 0: per direction W_ih (4H, in), gate order i, f, g, o.
        "w_ih_l0": nrm(ks[0], (NDIR, 4 * H, INPUT_DIM)),
        "b_ih_l0": nrm(ks[1], (NDIR, 4 * H)),
        "b_hh_l0": nrm(ks[2], (NDIR, 4 * H)),
        # LSTM layer 1: input is the 2H-wide concat of layer-0 directions.
        "w_ih_l1": nrm(ks[3], (NDIR, 4 * H, LSTM_FEAT)),
        "b_ih_l1": nrm(ks[4], (NDIR, 4 * H)),
        "b_hh_l1": nrm(ks[5], (NDIR, 4 * H)),
        # Linear layers in torch (out_features, in_features) layout.
        "wo":  nrm(ks[6],  (OUT1, LSTM_FEAT)), "bo":  nrm(ks[7],  (OUT1,)),
        "wf1": nrm(ks[8],  (OUT2, OUT1)),      "bf1": nrm(ks[9],  (OUT2,)),
        "wf2": nrm(ks[10], (OUT3, OUT2)),      "bf2": nrm(ks[11], (OUT3,)),
        "wf3": nrm(ks[12], (1, OUT3)),         "bf3": nrm(ks[13], (1,)),
    }


# ---------------- host-side packing (prune f-gate, interleave, fold, slab) ---
def pack_params(raw):
    H = HIDDEN

    def pack_gates(w_ih, b_ih, b_hh):
        # w_ih: (2, 4H, in) -> transpose to (2, in, 4H), drop f-gate columns,
        # interleave directions per gate: [i_f i_b | g_f g_b | o_f o_b].
        w = jnp.transpose(w_ih, (0, 2, 1))          # (2, in, 4H)
        b = b_ih + b_hh                             # (2, 4H)
        wcols, bcols = [], []
        for gate in (0, 2, 3):                      # i, g, o  (skip f at 1)
            for d in range(NDIR):
                wcols.append(w[d, :, gate * H:(gate + 1) * H])
                bcols.append(b[d, gate * H:(gate + 1) * H])
        return (jnp.concatenate(wcols, axis=1),               # (in, 192)
                jnp.concatenate(bcols)[None, :])               # (1, 192)

    w0, b0 = pack_gates(raw["w_ih_l0"], raw["b_ih_l0"], raw["b_hh_l0"])
    w1, b1 = pack_gates(raw["w_ih_l1"], raw["b_ih_l1"], raw["b_hh_l1"])
    wg = jnp.stack([w0, w1])                        # (2, 64, 192)
    bg = jnp.stack([b0, b1])                        # (2, 1, 192)

    # Fold self.output and layer_final[0] (no nonlinearity between them):
    #   y = (x @ wo.T + bo) @ wf1.T + bf1 = x @ (wo.T @ wf1.T) + (bo @ wf1.T + bf1)
    wa = raw["wo"].T @ raw["wf1"].T                 # (64, 16)
    ba = raw["bo"] @ raw["wf1"].T + raw["bf1"]      # (16,)

    w_mlp = jnp.zeros((LSTM_FEAT, 2 * OUT2), jnp.float32)      # (64, 32)
    w_mlp = w_mlp.at[:, 0:OUT2].set(wa)
    w_mlp = w_mlp.at[0:OUT2, OUT2:OUT2 + OUT3].set(raw["wf2"].T)

    v_mlp = jnp.zeros((2, 2 * OUT2), jnp.float32)               # (2, 32)
    v_mlp = v_mlp.at[0, 0:OUT2].set(ba)
    v_mlp = v_mlp.at[0, OUT2:OUT2 + OUT3].set(raw["bf2"])
    v_mlp = v_mlp.at[0, OUT2 + OUT3:OUT2 + 2 * OUT3].set(raw["wf3"][0])
    v_mlp = v_mlp.at[1, 0].set(raw["bf3"][0])

    return {"wg": wg, "bg": bg, "w_mlp": w_mlp, "v_mlp": v_mlp}


# ---------------- pure-JAX reference (original, unfolded math) ---------------
def reference_forward(x, raw):
    H = HIDDEN

    def lstm_layer(inp, w_ih, b_ih, b_hh):
        outs = []
        for d in range(NDIR):
            g = inp @ w_ih[d].T + b_ih[d] + b_hh[d]
            i = jax.nn.sigmoid(g[:, 0 * H:1 * H])
            f = jax.nn.sigmoid(g[:, 1 * H:2 * H])
            gg = jnp.tanh(g[:, 2 * H:3 * H])
            o = jax.nn.sigmoid(g[:, 3 * H:4 * H])
            c = f * 0.0 + i * gg                    # c_prev = 0
            outs.append(o * jnp.tanh(c))
        return jnp.concatenate(outs, axis=-1)       # [h_fwd | h_bwd]

    h = lstm_layer(x, raw["w_ih_l0"], raw["b_ih_l0"], raw["b_hh_l0"])
    h = lstm_layer(h, raw["w_ih_l1"], raw["b_ih_l1"], raw["b_hh_l1"])
    h = jnp.where(h > 0, h, 0.2 * h)                # LeakyReLU(0.2)
    y = h @ raw["wo"].T + raw["bo"]
    y = jnp.tanh(y @ raw["wf1"].T + raw["bf1"])
    y = jnp.tanh(y @ raw["wf2"].T + raw["bf2"])
    return y @ raw["wf3"].T + raw["bf3"]


if __name__ == "__main__":
    key = jax.random.PRNGKey(0)
    kx, kp = jax.random.split(key)
    x = jax.random.normal(kx, (BATCH, INPUT_DIM), dtype=jnp.float32)

    raw = init_raw_params(kp)
    packed = pack_params(raw)

    out = jax.jit(lstm_predictor_forward)(x, packed)
    out = jax.block_until_ready(out)

    ref = reference_forward(x, raw)
    assert out.shape == (BATCH, 1)
    assert jnp.allclose(out, ref, atol=1e-4, rtol=1e-4), "mismatch vs reference"
    print("KERNEL_OK")
</pallas_src>

<mosaic_0001>
module attributes {stable_mosaic.version = 11 : i64} {
  func.func @lstm_predictor_kernel(%arg0: i32, %arg1: memref<8x64xf32, #tpu.memory_space<vmem>>, %arg2: memref<2x64x192xf32, #tpu.memory_space<vmem>>, %arg3: memref<2x1x192xf32, #tpu.memory_space<vmem>>, %arg4: memref<64x32xf32, #tpu.memory_space<vmem>>, %arg5: memref<2x32xf32, #tpu.memory_space<vmem>>, %arg6: memref<8x1xf32, #tpu.memory_space<vmem>>) attributes {dimension_semantics = [#tpu.dimension_semantics<parallel>], iteration_bounds = array<i64: 1>, scalar_prefetch = 0 : i64, scratch_operands = 0 : i64, tpu.core_type = #tpu.core_type<tc>, window_params = [{transform_indices = @transform_0, window_bounds = array<i64: 8, 64>}, {pipeline_mode = #tpu.pipeline_mode<synchronous>, transform_indices = @transform_1, window_bounds = array<i64: 2, 64, 192>}, {pipeline_mode = #tpu.pipeline_mode<synchronous>, transform_indices = @transform_2, window_bounds = array<i64: 2, 1, 192>}, {pipeline_mode = #tpu.pipeline_mode<synchronous>, transform_indices = @transform_3, window_bounds = array<i64: 64, 32>}, {pipeline_mode = #tpu.pipeline_mode<synchronous>, transform_indices = @transform_4, window_bounds = array<i64: 2, 32>}, {transform_indices = @transform_5, window_bounds = array<i64: 8, 1>}]} {
    %c0 = arith.constant 0 : index
    %c0_0 = arith.constant 0 : index
    %0 = vector.load %arg1[%c0, %c0_0] : memref<8x64xf32, #tpu.memory_space<vmem>>, vector<8x64xf32>
    %c0_1 = arith.constant 0 : index
    %c0_2 = arith.constant 0 : index
    %c0_3 = arith.constant 0 : index
    %1 = vector.load %arg2[%c0_1, %c0_2, %c0_3] : memref<2x64x192xf32, #tpu.memory_space<vmem>>, vector<1x64x192xf32>
    %2 = vector.shape_cast %1 : vector<1x64x192xf32> to vector<64x192xf32>
    %cst = arith.constant dense<0.000000e+00> : vector<8x192xf32>
    %3 = tpu.matmul %0, %2, %cst {dimension_numbers = #tpu.dot_dimension_numbers<[1], [0], [0], [1], [0, 0, 1, 1], [], []>} : vector<8x64xf32>, vector<64x192xf32>, vector<8x192xf32> -> vector<8x192xf32>
    %c0_4 = arith.constant 0 : index
    %c0_5 = arith.constant 0 : index
    %c0_6 = arith.constant 0 : index
    %4 = vector.load %arg3[%c0_4, %c0_5, %c0_6] : memref<2x1x192xf32, #tpu.memory_space<vmem>>, vector<1x1x192xf32>
    %5 = vector.shape_cast %4 : vector<1x1x192xf32> to vector<1x192xf32>
    %6 = vector.broadcast %5 : vector<1x192xf32> to vector<8x192xf32>
    %7 = arith.addf %3, %6 : vector<8x192xf32>
    %8 = vector.extract_strided_slice %7 {offsets = [0, 0], sizes = [8, 64], strides = [1, 1]} : vector<8x192xf32> to vector<8x64xf32>
    %9 = arith.negf %8 : vector<8x64xf32>
    %10 = math.exp %9 : vector<8x64xf32>
    %cst_7 = arith.constant 1.000000e+00 : f32
    %11 = vector.broadcast %cst_7 : f32 to vector<8x64xf32>
    %12 = arith.addf %11, %10 : vector<8x64xf32>
    %13 = arith.divf %11, %12 : vector<8x64xf32>
    %14 = vector.extract_strided_slice %7 {offsets = [0, 64], sizes = [8, 64], strides = [1, 1]} : vector<8x192xf32> to vector<8x64xf32>
    %15 = math.tanh %14 : vector<8x64xf32>
    %16 = vector.extract_strided_slice %7 {offsets = [0, 128], sizes = [8, 64], strides = [1, 1]} : vector<8x192xf32> to vector<8x64xf32>
    %17 = arith.negf %16 : vector<8x64xf32>
    %18 = math.exp %17 : vector<8x64xf32>
    %cst_8 = arith.constant 1.000000e+00 : f32
    %19 = vector.broadcast %cst_8 : f32 to vector<8x64xf32>
    %20 = arith.addf %19, %18 : vector<8x64xf32>
    %21 = arith.divf %19, %20 : vector<8x64xf32>
    %22 = arith.mulf %13, %15 : vector<8x64xf32>
    %23 = math.tanh %22 : vector<8x64xf32>
    %24 = arith.mulf %21, %23 : vector<8x64xf32>
    %c1 = arith.constant 1 : index
    %c0_9 = arith.constant 0 : index
    %c0_10 = arith.constant 0 : index
    %25 = vector.load %arg2[%c1, %c0_9, %c0_10] : memref<2x64x192xf32, #tpu.memory_space<vmem>>, vector<1x64x192xf32>
    %26 = vector.shape_cast %25 : vector<1x64x192xf32> to vector<64x192xf32>
    %cst_11 = arith.constant dense<0.000000e+00> : vector<8x192xf32>
    %27 = tpu.matmul %24, %26, %cst_11 {dimension_numbers = #tpu.dot_dimension_numbers<[1], [0], [0], [1], [0, 0, 1, 1], [], []>} : vector<8x64xf32>, vector<64x192xf32>, vector<8x192xf32> -> vector<8x192xf32>
    %c1_12 = arith.constant 1 : index
    %c0_13 = arith.constant 0 : index
    %c0_14 = arith.constant 0 : index
    %28 = vector.load %arg3[%c1_12, %c0_13, %c0_14] : memref<2x1x192xf32, #tpu.memory_space<vmem>>, vector<1x1x192xf32>
    %29 = vector.shape_cast %28 : vector<1x1x192xf32> to vector<1x192xf32>
    %30 = vector.broadcast %29 : vector<1x192xf32> to vector<8x192xf32>
    %31 = arith.addf %27, %30 : vector<8x192xf32>
    %32 = vector.extract_strided_slice %31 {offsets = [0, 0], sizes = [8, 64], strides = [1, 1]} : vector<8x192xf32> to vector<8x64xf32>
    %33 = arith.negf %32 : vector<8x64xf32>
    %34 = math.exp %33 : vector<8x64xf32>
    %cst_15 = arith.constant 1.000000e+00 : f32
    %35 = vector.broadcast %cst_15 : f32 to vector<8x64xf32>
    %36 = arith.addf %35, %34 : vector<8x64xf32>
    %37 = arith.divf %35, %36 : vector<8x64xf32>
    %38 = vector.extract_strided_slice %31 {offsets = [0, 64], sizes = [8, 64], strides = [1, 1]} : vector<8x192xf32> to vector<8x64xf32>
    %39 = math.tanh %38 : vector<8x64xf32>
    %40 = vector.extract_strided_slice %31 {offsets = [0, 128], sizes = [8, 64], strides = [1, 1]} : vector<8x192xf32> to vector<8x64xf32>
    %41 = arith.negf %40 : vector<8x64xf32>
    %42 = math.exp %41 : vector<8x64xf32>
    %cst_16 = arith.constant 1.000000e+00 : f32
    %43 = vector.broadcast %cst_16 : f32 to vector<8x64xf32>
    %44 = arith.addf %43, %42 : vector<8x64xf32>
    %45 = arith.divf %43, %44 : vector<8x64xf32>
    %46 = arith.mulf %37, %39 : vector<8x64xf32>
    %47 = math.tanh %46 : vector<8x64xf32>
    %48 = arith.mulf %45, %47 : vector<8x64xf32>
    %cst_17 = arith.constant 0.000000e+00 : f32
    %49 = vector.broadcast %cst_17 : f32 to vector<8x64xf32>
    %50 = arith.cmpf ogt, %48, %49 : vector<8x64xf32>
    %cst_18 = arith.constant 2.000000e-01 : f32
    %51 = vector.broadcast %cst_18 : f32 to vector<8x64xf32>
    %52 = arith.mulf %51, %48 : vector<8x64xf32>
    %53 = arith.select %50, %48, %52 : vector<8x64xi1>, vector<8x64xf32>
    %c0_19 = arith.constant 0 : index
    %c0_20 = arith.constant 0 : index
    %54 = vector.load %arg4[%c0_19, %c0_20] : memref<64x32xf32, #tpu.memory_space<vmem>>, vector<64x16xf32>
    %cst_21 = arith.constant dense<0.000000e+00> : vector<8x16xf32>
    %55 = tpu.matmul %53, %54, %cst_21 {dimension_numbers = #tpu.dot_dimension_numbers<[1], [0], [0], [1], [0, 0, 1, 1], [], []>} : vector<8x64xf32>, vector<64x16xf32>, vector<8x16xf32> -> vector<8x16xf32>
    %c0_22 = arith.constant 0 : index
    %c0_23 = arith.constant 0 : index
    %56 = vector.load %arg5[%c0_22, %c0_23] : memref<2x32xf32, #tpu.memory_space<vmem>>, vector<1x16xf32>
    %57 = vector.broadcast %56 : vector<1x16xf32> to vector<8x16xf32>
    %58 = arith.addf %55, %57 : vector<8x16xf32>
    %59 = math.tanh %58 : vector<8x16xf32>
    %c0_24 = arith.constant 0 : index
    %c16 = arith.constant 16 : index
    %60 = vector.load %arg4[%c0_24, %c16] : memref<64x32xf32, #tpu.memory_space<vmem>>, vector<16x8xf32>
    %cst_25 = arith.constant dense<0.000000e+00> : vector<8x8xf32>
    %61 = tpu.matmul %59, %60, %cst_25 {dimension_numbers = #tpu.dot_dimension_numbers<[1], [0], [0], [1], [0, 0, 1, 1], [], []>} : vector<8x16xf32>, vector<16x8xf32>, vector<8x8xf32> -> vector<8x8xf32>
    %c0_26 = arith.constant 0 : index
    %c16_27 = arith.constant 16 : index
    %62 = vector.load %arg5[%c0_26, %c16_27] : memref<2x32xf32, #tpu.memory_space<vmem>>, vector<1x8xf32>
    %63 = vector.broadcast %62 : vector<1x8xf32> to vector<8x8xf32>
    %64 = arith.addf %61, %63 : vector<8x8xf32>
    %65 = math.tanh %64 : vector<8x8xf32>
    %c0_28 = arith.constant 0 : index
    %c24 = arith.constant 24 : index
    %66 = vector.load %arg5[%c0_28, %c24] : memref<2x32xf32, #tpu.memory_space<vmem>>, vector<1x8xf32>
    %c1_29 = arith.constant 1 : index
    %c0_30 = arith.constant 0 : index
    %67 = vector.load %arg5[%c1_29, %c0_30] : memref<2x32xf32, #tpu.memory_space<vmem>>, vector<1x1xf32>
    %68 = vector.broadcast %66 : vector<1x8xf32> to vector<8x8xf32>
    %69 = arith.mulf %65, %68 : vector<8x8xf32>
    %cst_31 = arith.constant dense<0.000000e+00> : vector<8xf32>
    %70 = vector.multi_reduction <add>, %69, %cst_31 [1] : vector<8x8xf32> to vector<8xf32>
    %71 = vector.shape_cast %70 : vector<8xf32> to vector<8x1xf32>
    %72 = vector.broadcast %67 : vector<1x1xf32> to vector<8x1xf32>
    %73 = arith.addf %71, %72 : vector<8x1xf32>
    %c0_32 = arith.constant 0 : index
    %c0_33 = arith.constant 0 : index
    %74 = vector.load %arg6[%c0_32, %c0_33] : memref<8x1xf32, #tpu.memory_space<vmem>>, vector<8x1xf32>
    tpu.vector_store %arg6[%c0_32, %c0_33], %73 {strides = array<i32>} : memref<8x1xf32, #tpu.memory_space<vmem>>, vector<8x1xf32>,
    return
  }
  func.func @transform_0(%arg0: i32) -> (i32, i32) {
    %c0_i32 = arith.constant 0 : i32
    %c0_i32_0 = arith.constant 0 : i32
    return %arg0, %c0_i32 : i32, i32
  }
  func.func @transform_1(%arg0: i32) -> (i32, i32, i32) {
    %c0_i32 = arith.constant 0 : i32
    %c0_i32_0 = arith.constant 0 : i32
    %c0_i32_1 = arith.constant 0 : i32
    %c0_i32_2 = arith.constant 0 : i32
    return %c0_i32, %c0_i32_0, %c0_i32_1 : i32, i32, i32
  }
  func.func @transform_2(%arg0: i32) -> (i32, i32, i32) {
    %c0_i32 = arith.constant 0 : i32
    %c0_i32_0 = arith.constant 0 : i32
    %c0_i32_1 = arith.constant 0 : i32
    %c0_i32_2 = arith.constant 0 : i32
    return %c0_i32, %c0_i32_0, %c0_i32_1 : i32, i32, i32
  }
  func.func @transform_3(%arg0: i32) -> (i32, i32) {
    %c0_i32 = arith.constant 0 : i32
    %c0_i32_0 = arith.constant 0 : i32
    %c0_i32_1 = arith.constant 0 : i32
    return %c0_i32, %c0_i32_0 : i32, i32
  }
  func.func @transform_4(%arg0: i32) -> (i32, i32) {
    %c0_i32 = arith.constant 0 : i32
    %c0_i32_0 = arith.constant 0 : i32
    %c0_i32_1 = arith.constant 0 : i32
    return %c0_i32, %c0_i32_0 : i32, i32
  }
  func.func @transform_5(%arg0: i32) -> (i32, i32) {
    %c0_i32 = arith.constant 0 : i32
    %c0_i32_0 = arith.constant 0 : i32
    return %arg0, %c0_i32 : i32, i32
  }
}

</mosaic_0001>

<llo_original>
// kernel: lstm_predictor_forward.1
$region0: #{lstm_predictor_forward.1}
  #allocation0 [shape = 'u32[]', space=smem, size = 0x4, offset = 0x4, fixed_abs, tag = 'smem constant byte address 0x4 - core index']
  #allocation1 [shape = 'u32[144,128]{1,0:T(1,128)}', space=vmem, size = 0x12000, scoped, tag = 'internal scratch']
  %s0 = inlined_call_operand.vmem [shape: f32[8,64], index: 0, kind: input, shape index: {}]
  %s1 = inlined_call_operand.hbm [shape: f32[2,64,192], index: 1, kind: input, shape index: {}]
  %s2 = inlined_call_operand.vmem [shape: f32[2,1,192], index: 2, kind: input, shape index: {}]
  %s3 = inlined_call_operand.vmem [shape: f32[64,32], index: 3, kind: input, shape index: {}]
  %s4 = inlined_call_operand.vmem [shape: f32[2,32], index: 4, kind: input, shape index: {}]
  %s5 = inlined_call_operand.vmem [shape: f32[8,1], index: 5, kind: output, shape index: {}]
  %s6 = sld [smem:[#allocation0]]
  $region34: #{lstm_predictor_forward.1} parent=0
    _
  %s8 = ssub.s32 1, %s6
  %s9 = scalar_select 0, %s8, %s6
  $region1: #{lstm_predictor_forward.1} parent=0
    #allocation2 [shape = 'u8[131072]{0}', space=vmem, size = 0x20000, scoped, tag = 'input window, operand 1, single buffered']
    #allocation3 [shape = 's32[1]{0}', space=sflag, size = 0x4, scoped, tag = 'scoped memory for lstm_predictor_forward.1']
    %10 = vsyncpa [#allocation3], 0
    // Predicated region
    $region2: #{lstm_predictor_forward.1} parent=1 // pred_check
      _
    $region3: #{lstm_predictor_forward.1} parent=1 // pred_check_branch
      %12 = sbr.rel (0) target = $region5
    $region4: #{lstm_predictor_forward.1} parent=1 // pred_region
      _
    $region5: #{lstm_predictor_forward.1} parent=1 // pred_fallthru
      _
    // Predicated region
    $region6: #{lstm_predictor_forward.1} parent=1 // pred_check
      _
    $region7: #{lstm_predictor_forward.1} parent=1 // pred_check_branch
      %14 = sbr.rel (0) target = $region9
    $region8: #{lstm_predictor_forward.1} parent=1 // pred_region
      %s16 = ssub.s32 4096, 4096
      %17 = vsyncadd [#allocation3], %s16
      %s18 = sshll.u32 [#allocation2], 4
      %s19 = int_to_ptr.vmem [resolvable:$true] %s18
      %24 = dma.hbm_to_vmem [thread:$0]  %s1, 4096, %s19, [#allocation3], 256, 256, 16
    $region9: #{lstm_predictor_forward.1} parent=1 // pred_fallthru
      _
    // Predicated region
    $region10: #{lstm_predictor_forward.1} parent=1 // pred_check
      _
    $region11: #{lstm_predictor_forward.1} parent=1 // pred_check_branch
      %26 = sbr.rel (0) target = $region13
    $region12: #{lstm_predictor_forward.1} parent=1 // pred_region
      _
    $region13: #{lstm_predictor_forward.1} parent=1 // pred_fallthru
      _
    // Predicated region
    $region14: #{lstm_predictor_forward.1} parent=1 // pred_check
      _
    $region15: #{lstm_predictor_forward.1} parent=1 // pred_check_branch
      %28 = sbr.rel (0) target = $region17
    $region16: #{lstm_predictor_forward.1} parent=1 // pred_region
      _
    $region17: #{lstm_predictor_forward.1} parent=1 // pred_fallthru
      _
    // Predicated region
    $region18: #{lstm_predictor_forward.1} parent=1 // pred_check
      _
    $region19: #{lstm_predictor_forward.1} parent=1 // pred_check_branch
      %30 = sbr.rel (0) target = $region21
    $region20: #{lstm_predictor_forward.1} parent=1 // pred_region
      _
    $region21: #{lstm_predictor_forward.1} parent=1 // pred_fallthru
      _
    // Predicated region
    $region22: #{lstm_predictor_forward.1} parent=1 // pred_check
      _
    $region23: #{lstm_predictor_forward.1} parent=1 // pred_check_branch
      %32 = sbr.rel (0) target = $region25
    $region24: #{lstm_predictor_forward.1} parent=1 // pred_region
      %33 = dma.done [#allocation3], 4096
    $region25: #{lstm_predictor_forward.1} parent=1 // pred_fallthru
      _
    %v34 = vld [vmem:[%s0] sm:$0xff]
    %v35 = vld [vmem:[#allocation2] sm:$0xff]
    %v36 = vld [vmem:[#allocation2 + $0x8] sm:$0xff]
    %v37 = vld [vmem:[#allocation2 + $0x10] sm:$0xff]
    %v38 = vld [vmem:[#allocation2 + $0x18] sm:$0xff]
    %v39 = vld [vmem:[#allocation2 + $0x20] sm:$0xff]
    %v40 = vld [vmem:[#allocation2 + $0x28] sm:$0xff]
    %v41 = vld [vmem:[#allocation2 + $0x30] sm:$0xff]
    %v42 = vld [vmem:[#allocation2 + $0x38] sm:$0xff]
    %v43 = vld [vmem:[#allocation2 + $0x40] sm:$0xff]
    %v44 = vld [vmem:[#allocation2 + $0x48] sm:$0xff]
    %v45 = vld [vmem:[#allocation2 + $0x50] sm:$0xff]
    %v46 = vld [vmem:[#allocation2 + $0x58] sm:$0xff]
    %v47 = vld [vmem:[#allocation2 + $0x60] sm:$0xff]
    %v48 = vld [vmem:[#allocation2 + $0x68] sm:$0xff]
    %v49 = vld [vmem:[#allocation2 + $0x70] sm:$0xff]
    %v50 = vld [vmem:[#allocation2 + $0x78] sm:$0xff]
    %v51 = vld [vmem:[%s2] sm:$0x3]
    %v53 = vlaneseq
    %v54 = vshrl.u32 %v53, 7
    %v55 = vsub.s32 0, %v54
    %v56 = vrot.slane %v51, %v55
    %v57 = vlaneseq
    %v58 = vshrl.u32 %v57, 7
    %v59 = vsub.s32 1, %v58
    %v60 = vrot.slane %v51, %v59
    %vm63 = vcmask 523264
    %v65 = vsel %vm63, %v34, 0
    %67 = vmatprep.subr.mxu0 %v36
    %68 = vmatpush1.msra.mxu0 %v35
    %69 = vmatprep.subr.mxu0 %v38
    %70 = vmatpush1.msra.mxu0 %v37
    %71 = vmatprep.subr.mxu0 %v40
    %72 = vmatpush1.msra.mxu0 %v39
    %73 = vmatprep.subr.mxu0 %v42
    %74 = vmatpush1.msra.mxu0 %v41
    %75 = vmatprep.subr.mxu0 %v44
    %76 = vmatpush1.msra.mxu0 %v43
    %77 = vmatprep.subr.mxu0 %v46
    %78 = vmatpush1.msra.mxu0 %v45
    %79 = vmatprep.subr.mxu0 %v48
    %80 = vmatpush1.msra.mxu0 %v47
    %81 = vmatprep.subr.mxu0 %v50
    %82 = vmatpush1.msra.mxu0 %v49
    %83 = vmatprep.subr.mxu0 0.0
    %84 = vmatpush1.msra.mxu0 0.0
    %85 = vmatprep.subr.mxu0 0.0
    %86 = vmatpush1.msra.mxu0 0.0
    %87 = vmatprep.subr.mxu0 0.0
    %88 = vmatpush1.msra.mxu0 0.0
    %89 = vmatprep.subr.mxu0 0.0
    %90 = vmatpush1.msra.mxu0 0.0
    %91 = vmatprep.subr.mxu0 0.0
    %92 = vmatpush1.msra.mxu0 0.0
    %93 = vmatprep.subr.mxu0 0.0
    %94 = vmatpush1.msra.mxu0 0.0
    %95 = vmatprep.subr.mxu0 0.0
    %96 = vmatpush1.msra.mxu0 0.0
    %97 = vmatprep.subr.mxu0 0.0
    %98 = vmatpush1.msra.mxu0 0.0
    %99 = vmatprep.subr.mxu0 0.0
    %100 = vmatpush1.msra.mxu0 0.0
    %101 = vmatprep.subr.mxu0 0.0
    %102 = vmatpush1.msra.mxu0 0.0
    %103 = vmatprep.subr.mxu0 0.0
    %104 = vmatpush1.msra.mxu0 0.0
    %105 = vmatprep.subr.mxu0 0.0
    %106 = vmatpush1.msra.mxu0 0.0
    %107 = vmatprep.subr.mxu0 0.0
    %108 = vmatpush1.msra.mxu0 0.0
    %109 = vmatprep.subr.mxu0 0.0
    %110 = vmatpush1.msra.mxu0 0.0
    %111 = vmatprep.subr.mxu0 0.0
    %112 = vmatpush1.msra.mxu0 0.0
    %113 = vmatprep.subr.mxu0 0.0
    %114 = vmatpush1.msra.mxu0 0.0
    %115 = vmatprep.subr.mxu0 0.0
    %116 = vmatpush1.msra.mxu0 0.0
    %117 = vmatprep.subr.mxu0 0.0
    %118 = vmatpush1.msra.mxu0 0.0
    %119 = vmatprep.subr.mxu0 0.0
    %120 = vmatpush1.msra.mxu0 0.0
    %121 = vmatprep.subr.mxu0 0.0
    %122 = vmatpush1.msra.mxu0 0.0
    %123 = vmatprep.subr.mxu0 0.0
    %124 = vmatpush1.msra.mxu0 0.0
    %125 = vmatprep.subr.mxu0 0.0
    %126 = vmatpush1.msra.mxu0 0.0
    %127 = vmatprep.subr.mxu0 0.0
    %128 = vmatpush1.msra.mxu0 0.0
    %129 = vmatprep.subr.mxu0 0.0
    %130 = vmatpush1.msra.mxu0 0.0
    %131 = vmatprep.mubr.f32.mxu0 0.0
    %132 = vmatmul.mubr.f32.gmra.mrb[0].mxu0 %v65
    %v133 = vpop.f32.mrb[0].mxu0
    %v134 = vadd.f32 %v56, %v133
    %v135 = vpop.f32.mrb[0].mxu0
    %v136 = vadd.f32 %v60, %v135
    %137 = vdwg.mxu0
    %v138 = vxor.u32 %v134, 2147483648
    %v139 = vmul.f32 %v138, 1.442695
    %v140 = vpow.pop %v139
    %v141 = vadd.f32 %v140, 1.0
    %v142 = vrcp.pop %v141
    %v143 = vmul.f32 1.0, %v142
    %v144 = vtanh.pop %v134
    %v145 = vxor.u32 %v136, 2147483648
    %v146 = vmul.f32 %v145, 1.442695
    %v147 = vpow.pop %v146
    %v148 = vadd.f32 %v147, 1.0
    %v149 = vrcp.pop %v148
    %v150 = vmul.f32 1.0, %v149
    %152 = vrot.lane.b32.xlu0 %v144, 64
    %v153 = vpop.permute.xlu0 %152
    %v155 = vmul.f32 %v143, %v153
    %v156 = vtanh.pop %v155
    %v157 = vmul.f32 %v150, %v156
    %s158 = scalar_lea.vmem [#allocation2], 128
    %v159 = vld [vmem:[%s158] sm:$0xff]
    %v160 = vld [vmem:[%s158 + $0x8] sm:$0xff]
    %v161 = vld [vmem:[%s158 + $0x10] sm:$0xff]
    %v162 = vld [vmem:[%s158 + $0x18] sm:$0xff]
    %v163 = vld [vmem:[%s158 + $0x20] sm:$0xff]
    %v164 = vld [vmem:[%s158 + $0x28] sm:$0xff]
    %v165 = vld [vmem:[%s158 + $0x30] sm:$0xff]
    %v166 = vld [vmem:[%s158 + $0x38] sm:$0xff]
    %v167 = vld [vmem:[%s158 + $0x40] sm:$0xff]
    %v168 = vld [vmem:[%s158 + $0x48] sm:$0xff]
    %v169 = vld [vmem:[%s158 + $0x50] sm:$0xff]
    %v170 = vld [vmem:[%s158 + $0x58] sm:$0xff]
    %v171 = vld [vmem:[%s158 + $0x60] sm:$0xff]
    %v172 = vld [vmem:[%s158 + $0x68] sm:$0xff]
    %v173 = vld [vmem:[%s158 + $0x70] sm:$0xff]
    %v174 = vld [vmem:[%s158 + $0x78] sm:$0xff]
    %s175 = scalar_lea.vmem %s2, 2
    %v176 = vld [vmem:[%s175] sm:$0x3]
    %v178 = vlaneseq
    %v179 = vshrl.u32 %v178, 7
    %v180 = vsub.s32 0, %v179
    %v181 = vrot.slane %v176, %v180
    %v182 = vlaneseq
    %v183 = vshrl.u32 %v182, 7
    %v184 = vsub.s32 1, %v183
    %v185 = vrot.slane %v176, %v184
    %v189 = vsel %vm63, %v157, 0
    %191 = vmatprep.subr.mxu0 %v160
    %192 = vmatpush1.msra.mxu0 %v159
    %193 = vmatprep.subr.mxu0 %v162
    %194 = vmatpush1.msra.mxu0 %v161
    %195 = vmatprep.subr.mxu0 %v164
    %196 = vmatpush1.msra.mxu0 %v163
    %197 = vmatprep.subr.mxu0 %v166
    %198 = vmatpush1.msra.mxu0 %v165
    %199 = vmatprep.subr.mxu0 %v168
    %200 = vmatpush1.msra.mxu0 %v167
    %201 = vmatprep.subr.mxu0 %v170
    %202 = vmatpush1.msra.mxu0 %v169
    %203 = vmatprep.subr.mxu0 %v172
    %204 = vmatpush1.msra.mxu0 %v171
    %205 = vmatprep.subr.mxu0 %v174
    %206 = vmatpush1.msra.mxu0 %v173
    %207 = vmatprep.subr.mxu0 0.0
    %208 = vmatpush1.msra.mxu0 0.0
    %209 = vmatprep.subr.mxu0 0.0
    %210 = vmatpush1.msra.mxu0 0.0
    %211 = vmatprep.subr.mxu0 0.0
    %212 = vmatpush1.msra.mxu0 0.0
    %213 = vmatprep.subr.mxu0 0.0
    %214 = vmatpush1.msra.mxu0 0.0
    %215 = vmatprep.subr.mxu0 0.0
    %216 = vmatpush1.msra.mxu0 0.0
    %217 = vmatprep.subr.mxu0 0.0
    %218 = vmatpush1.msra.mxu0 0.0
    %219 = vmatprep.subr.mxu0 0.0
    %220 = vmatpush1.msra.mxu0 0.0
    %221 = vmatprep.subr.mxu0 0.0
    %222 = vmatpush1.msra.mxu0 0.0
    %223 = vmatprep.subr.mxu0 0.0
    %224 = vmatpush1.msra.mxu0 0.0
    %225 = vmatprep.subr.mxu0 0.0
    %226 = vmatpush1.msra.mxu0 0.0
    %227 = vmatprep.subr.mxu0 0.0
    %228 = vmatpush1.msra.mxu0 0.0
    %229 = vmatprep.subr.mxu0 0.0
    %230 = vmatpush1.msra.mxu0 0.0
    %231 = vmatprep.subr.mxu0 0.0
    %232 = vmatpush1.msra.mxu0 0.0
    %233 = vmatprep.subr.mxu0 0.0
    %234 = vmatpush1.msra.mxu0 0.0
    %235 = vmatprep.subr.mxu0 0.0
    %236 = vmatpush1.msra.mxu0 0.0
    %237 = vmatprep.subr.mxu0 0.0
    %238 = vmatpush1.msra.mxu0 0.0
    %239 = vmatprep.subr.mxu0 0.0
    %240 = vmatpush1.msra.mxu0 0.0
    %241 = vmatprep.subr.mxu0 0.0
    %242 = vmatpush1.msra.mxu0 0.0
    %243 = vmatprep.subr.mxu0 0.0
    %244 = vmatpush1.msra.mxu0 0.0
    %245 = vmatprep.subr.mxu0 0.0
    %246 = vmatpush1.msra.mxu0 0.0
    %247 = vmatprep.subr.mxu0 0.0
    %248 = vmatpush1.msra.mxu0 0.0
    %249 = vmatprep.subr.mxu0 0.0
    %250 = vmatpush1.msra.mxu0 0.0
    %251 = vmatprep.subr.mxu0 0.0
    %252 = vmatpush1.msra.mxu0 0.0
    %253 = vmatprep.subr.mxu0 0.0
    %254 = vmatpush1.msra.mxu0 0.0
    %255 = vmatprep.mubr.f32.mxu0 0.0
    %256 = vmatmul.mubr.f32.gmra.mrb[0].mxu0 %v189
    %v257 = vpop.f32.mrb[0].mxu0
    %v258 = vadd.f32 %v181, %v257
    %v259 = vpop.f32.mrb[0].mxu0
    %v260 = vadd.f32 %v185, %v259
    %261 = vdwg.mxu0
    %v262 = vxor.u32 %v258, 2147483648
    %v263 = vmul.f32 %v262, 1.442695
    %v264 = vpow.pop %v263
    %v265 = vadd.f32 %v264, 1.0
    %v266 = vrcp.pop %v265
    %v267 = vmul.f32 1.0, %v266
    %v268 = vtanh.pop %v258
    %v269 = vxor.u32 %v260, 2147483648
    %v270 = vmul.f32 %v269, 1.442695
    %v271 = vpow.pop %v270
    %v272 = vadd.f32 %v271, 1.0
    %v273 = vrcp.pop %v272
    %v274 = vmul.f32 1.0, %v273
    %276 = vrot.lane.b32.xlu0 %v268, 64
    %v277 = vpop.permute.xlu0 %276
    %v279 = vmul.f32 %v267, %v277
    %v280 = vtanh.pop %v279
    %v281 = vmul.f32 %v274, %v280
    %vm282 = vcmp.gt.f32.partialorder %v281, 0.0
    %v283 = vmul.f32 %v281, 0.2
    %v284 = vsel %vm282, %v281, %v283
    %v285 = vld [vmem:[%s3] sm:$0xff]
    %v286 = vld [vmem:[%s3 + $0x8] sm:$0xff]
    %v287 = vld [vmem:[%s3 + $0x10] sm:$0xff]
    %v288 = vld [vmem:[%s3 + $0x18] sm:$0xff]
    %v289 = vld [vmem:[%s3 + $0x20] sm:$0xff]
    %v290 = vld [vmem:[%s3 + $0x28] sm:$0xff]
    %v291 = vld [vmem:[%s3 + $0x30] sm:$0xff]
    %v292 = vld [vmem:[%s3 + $0x38] sm:$0xff]
    %v293 = vld [vmem:[%s4] sm:$0x1]
    %v294 = vlaneseq
    %v295 = vshrl.u32 %v294, 7
    %v296 = vsub.s32 0, %v295
    %v297 = vrot.slane %v293, %v296
    %v299 = vsel %vm63, %v284, 0
    %301 = vmatprep.subr.mxu0 0.0
    %302 = vmatpush1.msra.mxu0 %v285
    %303 = vmatprep.subr.mxu0 0.0
    %304 = vmatpush1.msra.mxu0 %v286
    %305 = vmatprep.subr.mxu0 0.0
    %306 = vmatpush1.msra.mxu0 %v287
    %307 = vmatprep.subr.mxu0 0.0
    %308 = vmatpush1.msra.mxu0 %v288
    %309 = vmatprep.subr.mxu0 0.0
    %310 = vmatpush1.msra.mxu0 %v289
    %311 = vmatprep.subr.mxu0 0.0
    %312 = vmatpush1.msra.mxu0 %v290
    %313 = vmatprep.subr.mxu0 0.0
    %314 = vmatpush1.msra.mxu0 %v291
    %315 = vmatprep.subr.mxu0 0.0
    %316 = vmatpush1.msra.mxu0 %v292
    %317 = vmatprep.subr.mxu0 0.0
    %318 = vmatpush1.msra.mxu0 0.0
    %319 = vmatprep.subr.mxu0 0.0
    %320 = vmatpush1.msra.mxu0 0.0
    %321 = vmatprep.subr.mxu0 0.0
    %322 = vmatpush1.msra.mxu0 0.0
    %323 = vmatprep.subr.mxu0 0.0
    %324 = vmatpush1.msra.mxu0 0.0
    %325 = vmatprep.subr.mxu0 0.0
    %326 = vmatpush1.msra.mxu0 0.0
    %327 = vmatprep.subr.mxu0 0.0
    %328 = vmatpush1.msra.mxu0 0.0
    %329 = vmatprep.subr.mxu0 0.0
    %330 = vmatpush1.msra.mxu0 0.0
    %331 = vmatprep.subr.mxu0 0.0
    %332 = vmatpush1.msra.mxu0 0.0
    %333 = vmatprep.subr.mxu0 0.0
    %334 = vmatpush1.msra.mxu0 0.0
    %335 = vmatprep.subr.mxu0 0.0
    %336 = vmatpush1.msra.mxu0 0.0
    %337 = vmatprep.subr.mxu0 0.0
    %338 = vmatpush1.msra.mxu0 0.0
    %339 = vmatprep.subr.mxu0 0.0
    %340 = vmatpush1.msra.mxu0 0.0
    %341 = vmatprep.subr.mxu0 0.0
    %342 = vmatpush1.msra.mxu0 0.0
    %343 = vmatprep.subr.mxu0 0.0
    %344 = vmatpush1.msra.mxu0 0.0
    %345 = vmatprep.subr.mxu0 0.0
    %346 = vmatpush1.msra.mxu0 0.0
    %347 = vmatprep.subr.mxu0 0.0
    %348 = vmatpush1.msra.mxu0 0.0
    %349 = vmatprep.subr.mxu0 0.0
    %350 = vmatpush1.msra.mxu0 0.0
    %351 = vmatprep.subr.mxu0 0.0
    %352 = vmatpush1.msra.mxu0 0.0
    %353 = vmatprep.subr.mxu0 0.0
    %354 = vmatpush1.msra.mxu0 0.0
    %355 = vmatprep.subr.mxu0 0.0
    %356 = vmatpush1.msra.mxu0 0.0
    %357 = vmatprep.subr.mxu0 0.0
    %358 = vmatpush1.msra.mxu0 0.0
    %359 = vmatprep.subr.mxu0 0.0
    %360 = vmatpush1.msra.mxu0 0.0
    %361 = vmatprep.subr.mxu0 0.0
    %362 = vmatpush1.msra.mxu0 0.0
    %363 = vmatprep.subr.mxu0 0.0
    %364 = vmatpush1.msra.mxu0 0.0
    %365 = vmatprep.mubr.f32.mxu0 0.0
    %366 = vmatmul.mubr.f32.gmra.mrb[0].mxu0 %v299
    %v367 = vpop.f32.mrb[0].mxu0
    %v368 = vadd.f32 %v297, %v367
    %v369 = vpop.f32.mrb[0].mxu0
    %370 = vdwg.mxu0
    %v371 = vtanh.pop %v368
    %v372 = vld [vmem:[%s3] sm:$0xff]
    %v373 = vld [vmem:[%s3 + $0x8] sm:$0xff]
    %376 = vrot.lane.b32.xlu0 %v372, 112
    %v377 = vpop.permute.xlu0 %376
    %378 = vrot.lane.b32.xlu0 %v373, 112
    %v379 = vpop.permute.xlu0 %378
    %383 = vrot.lane.b32.xlu0 %v297, 112
    %v384 = vpop.permute.xlu0 %383
    %vm386 = vcmask 130048
    %v388 = vsel %vm386, %v371, 0
    %390 = vmatprep.subr.mxu0 0.0
    %391 = vmatpush1.msra.mxu0 %v377
    %392 = vmatprep.subr.mxu0 0.0
    %393 = vmatpush1.msra.mxu0 %v379
    %394 = vmatprep.subr.mxu0 0.0
    %395 = vmatpush1.msra.mxu0 0.0
    %396 = vmatprep.subr.mxu0 0.0
    %397 = vmatpush1.msra.mxu0 0.0
    %398 = vmatprep.subr.mxu0 0.0
    %399 = vmatpush1.msra.mxu0 0.0
    %400 = vmatprep.subr.mxu0 0.0
    %401 = vmatpush1.msra.mxu0 0.0
    %402 = vmatprep.subr.mxu0 0.0
    %403 = vmatpush1.msra.mxu0 0.0
    %404 = vmatprep.subr.mxu0 0.0
    %405 = vmatpush1.msra.mxu0 0.0
    %406 = vmatprep.subr.mxu0 0.0
    %407 = vmatpush1.msra.mxu0 0.0
    %408 = vmatprep.subr.mxu0 0.0
    %409 = vmatpush1.msra.mxu0 0.0
    %410 = vmatprep.subr.mxu0 0.0
    %411 = vmatpush1.msra.mxu0 0.0
    %412 = vmatprep.subr.mxu0 0.0
    %413 = vmatpush1.msra.mxu0 0.0
    %414 = vmatprep.subr.mxu0 0.0
    %415 = vmatpush1.msra.mxu0 0.0
    %416 = vmatprep.subr.mxu0 0.0
    %417 = vmatpush1.msra.mxu0 0.0
    %418 = vmatprep.subr.mxu0 0.0
    %419 = vmatpush1.msra.mxu0 0.0
    %420 = vmatprep.subr.mxu0 0.0
    %421 = vmatpush1.msra.mxu0 0.0
    %422 = vmatprep.subr.mxu0 0.0
    %423 = vmatpush1.msra.mxu0 0.0
    %424 = vmatprep.subr.mxu0 0.0
    %425 = vmatpush1.msra.mxu0 0.0
    %426 = vmatprep.subr.mxu0 0.0
    %427 = vmatpush1.msra.mxu0 0.0
    %428 = vmatprep.subr.mxu0 0.0
    %429 = vmatpush1.msra.mxu0 0.0
    %430 = vmatprep.subr.mxu0 0.0
    %431 = vmatpush1.msra.mxu0 0.0
    %432 = vmatprep.subr.mxu0 0.0
    %433 = vmatpush1.msra.mxu0 0.0
    %434 = vmatprep.subr.mxu0 0.0
    %435 = vmatpush1.msra.mxu0 0.0
    %436 = vmatprep.subr.mxu0 0.0
    %437 = vmatpush1.msra.mxu0 0.0
    %438 = vmatprep.subr.mxu0 0.0
    %439 = vmatpush1.msra.mxu0 0.0
    %440 = vmatprep.subr.mxu0 0.0
    %441 = vmatpush1.msra.mxu0 0.0
    %442 = vmatprep.subr.mxu0 0.0
    %443 = vmatpush1.msra.mxu0 0.0
    %444 = vmatprep.subr.mxu0 0.0
    %445 = vmatpush1.msra.mxu0 0.0
    %446 = vmatprep.subr.mxu0 0.0
    %447 = vmatpush1.msra.mxu0 0.0
    %448 = vmatprep.subr.mxu0 0.0
    %449 = vmatpush1.msra.mxu0 0.0
    %450 = vmatprep.subr.mxu0 0.0
    %451 = vmatpush1.msra.mxu0 0.0
    %452 = vmatprep.subr.mxu0 0.0
    %453 = vmatpush1.msra.mxu0 0.0
    %454 = vmatprep.mubr.f32.mxu0 0.0
    %455 = vmatmul.mubr.f32.gmra.mrb[0].mxu0 %v388
    %v456 = vpop.f32.mrb[0].mxu0
    %v457 = vadd.f32 %v384, %v456
    %v458 = vpop.f32.mrb[0].mxu0
    %459 = vdwg.mxu0
    %v460 = vtanh.pop %v457
    %v461 = vld [vmem:[%s4 + $0x1] sm:$0x1]
    %462 = vrot.lane.b32.xlu0 %v297, 104
    %v463 = vpop.permute.xlu0 %462
    %v465 = vmul.f32 %v460, %v463
    %vm466 = vcmask 64512
    %v467 = vsel %vm466, %v465, 0.0
    %468 = vadd.xlane.f32.xlu0 %v467
    %v469 = vpop.xlane.xlu0 %468
    %v470 = vlaneseq
    %v471 = vshrl.u32 %v470, 7
    %v472 = vsub.s32 0, %v471
    %v473 = vrot.slane %v461, %v472
    %v474 = vadd.f32 %v469, %v473
    %vm475 = vcmask 7168
    %476 = vst.msk [vmem:[%s5] sm:$0xff] %vm475, %v474
    // Predicated region
    $region26: #{lstm_predictor_forward.1} parent=1 // pred_check
      _
    $region27: #{lstm_predictor_forward.1} parent=1 // pred_check_branch
      %478 = sbr.rel (0) target = $region29
    $region28: #{lstm_predictor_forward.1} parent=1 // pred_region
      _
    $region29: #{lstm_predictor_forward.1} parent=1 // pred_fallthru
      _
    // Predicated region
    $region30: #{lstm_predictor_forward.1} parent=1 // pred_check
      _
    $region31: #{lstm_predictor_forward.1} parent=1 // pred_check_branch
      %480 = sbr.rel (0) target = $region33
    $region32: #{lstm_predictor_forward.1} parent=1 // pred_region
      _
    $region33: #{lstm_predictor_forward.1} parent=1 // pred_fallthru
      _
    %481 = vsyncpa [#allocation3], 1

</llo_original>
